<compile_context>
chip_gen: v7x
topology: tpu7x:2x2x1
jax: 0.10.0
libtpu: 0.0.40
codegen_flags: <defaults>
</compile_context>

<pallas_src>
import numpy as np
import jax
import jax.numpy as jnp
from jax.experimental import pallas as pl
from jax.experimental import pallas as pl  # noqa: F401 (kept grouped below)
from jax.experimental.pallas import tpu as pltpu  # noqa: F401  (not needed for the no-grid call)

# ---- small, module-consistent sizes (config.embedding_dim / num_filters scaled down) ----
B = 2           # batch
S = 8           # pad_size (sequence length)
E = 32          # embedding_dim
F = 128         # num_filters
KS = (2, 3, 4)  # conv kernel heights
KMAX = KS[-1]            # 4
LPAD = 8                 # time steps per batch after padding (valid L is 7/6/5)
KW = KMAX * E            # 128 = fused contraction dim
NF = len(KS) * F         # 384 = fused output dim


def convpool_kernel(win_ref, w_ref, b_ref, mask_ref, o_ref):
    # win_ref: (B*LPAD, KW) bf16 im2col windows; w_ref: (KW, NF) bf16 packed
    # weights; b_ref: (1, NF) f32 packed bias; mask_ref: (B*LPAD, NF) f32
    # additive mask (0 valid / -1e30 invalid); o_ref: (B, NF) f32.
    y = jnp.dot(win_ref[...], w_ref[...],
                preferred_element_type=jnp.float32)     # one (16,128)@(128,384) MXU op
    y = y + mask_ref[...]                               # kill invalid (t, branch) pre-pool
    # (16,384) -> (2,8,384) is a free sublane regroup (LPAD == f32 sublane tile);
    # max over axis=1 is a per-block sublane reduction.
    pooled = jnp.max(y.reshape(B, LPAD, NF), axis=1)    # (B, NF)
    # Bias + ReLU only on the small pooled tile (exact: bias is time-invariant,
    # ReLU is monotone).
    o_ref[...] = jnp.maximum(pooled + b_ref[...], 0.0)


_CONVPOOL = pl.pallas_call(
    convpool_kernel,
    out_shape=jax.ShapeDtypeStruct((B, NF), jnp.float32),
    # No grid / no BlockSpecs: single step, whole (tiny) arrays resident in VMEM.
    cost_estimate=pl.CostEstimate(
        flops=2 * B * LPAD * KW * NF,
        transcendentals=0,
        bytes_accessed=(2 * (B * LPAD * KW + KW * NF)          # bf16 windows + weights
                        + 4 * (NF + B * LPAD * NF + B * NF))), # f32 bias + mask + out
)


# ---------------- init-time (call once, outside the per-call path) ----------------

def pack_params(w2, b2, w3, b3, w4, b4):
    """Pack the 3 conv weights/biases into one (KW, NF) bf16 weight and (1, NF) f32 bias."""
    w_packed = jnp.zeros((KW, NF), jnp.float32)
    for jdx, w in enumerate((w2, w3, w4)):
        k = w.shape[0]
        w_packed = w_packed.at[:k * E, jdx * F:(jdx + 1) * F].set(w.reshape(k * E, F))
    b_packed = jnp.concatenate([b2, b3, b4], axis=1)            # (1, NF) f32
    return w_packed.astype(jnp.bfloat16), b_packed


def make_neg_mask():
    """Trace-time (numpy) additive mask: 0 where (t, branch) is a valid conv
    output, -1e30 where it is not (branch j has width k=j+2; valid iff t+j <= S-2)."""
    t = np.arange(B * LPAD) % LPAD
    j = np.arange(NF) // F
    invalid = (t[:, None] + j[None, :]) > (S - 2)
    return jnp.asarray(np.where(invalid, -1e30, 0.0).astype(np.float32))


# ---------------- per-call path ----------------

def _im2col(x):
    """x: (B, S, E) -> lane-dense (B*LPAD, KMAX*E) sliding windows (zero padded)."""
    x_pad = jnp.pad(x, ((0, 0), (0, KMAX), (0, 0)))             # (B, S+KMAX, E)
    win = jnp.concatenate(
        [x_pad[:, dk:dk + LPAD, :] for dk in range(KMAX)], axis=-1)  # (B, LPAD, KW)
    return win.reshape(B * LPAD, KW)


@jax.jit
def conv_pool(x, w_packed, b_packed, neg_mask):
    """x: (B, S, E) f32; packed params from pack_params(); -> (B, 3F) f32."""
    windows = _im2col(x).astype(jnp.bfloat16)   # bf16 MXU inputs, f32 accumulation
    return _CONVPOOL(windows, w_packed, b_packed, neg_mask)


# ---------------- pure-JAX reference (mirrors the PyTorch forward) ----------------

def reference(x, w2, b2, w3, b3, w4, b4):
    outs = []
    for w, b in ((w2, b2), (w3, b3), (w4, b4)):
        k = w.shape[0]
        L = S - k + 1
        conv = jnp.stack(
            [jnp.einsum("bke,kef->bf", x[:, t:t + k, :], w) for t in range(L)],
            axis=1) + b
        conv = jnp.maximum(conv, 0.0)
        outs.append(jnp.max(conv, axis=1))      # (B, F)
    return jnp.concatenate(outs, axis=1)        # (B, 3F)


if __name__ == "__main__":
    key = jax.random.PRNGKey(0)
    ks = jax.random.split(key, 7)
    x = jax.random.normal(ks[0], (B, S, E), jnp.float32)
    # deterministic parameter init (synthetic, not a checkpoint)
    w2 = jax.random.normal(ks[1], (KS[0], E, F), jnp.float32) * 0.05
    b2 = jax.random.normal(ks[2], (1, F), jnp.float32) * 0.05
    w3 = jax.random.normal(ks[3], (KS[1], E, F), jnp.float32) * 0.05
    b3 = jax.random.normal(ks[4], (1, F), jnp.float32) * 0.05
    w4 = jax.random.normal(ks[5], (KS[2], E, F), jnp.float32) * 0.05
    b4 = jax.random.normal(ks[6], (1, F), jnp.float32) * 0.05

    # One-time init-side packing (hoisted out of the per-call path).
    w_packed, b_packed = pack_params(w2, b2, w3, b3, w4, b4)
    neg_mask = make_neg_mask()

    out = conv_pool(x, w_packed, b_packed, neg_mask)
    jax.block_until_ready(out)

    ref = reference(x, w2, b2, w3, b3, w4, b4)
    assert out.shape == (B, 3 * F)
    # Tolerance relaxed vs. pure-f32 because MXU inputs are bf16 (f32 accumulate).
    assert jnp.allclose(out, ref, atol=5e-2, rtol=5e-2), "mismatch vs reference"
    print("KERNEL_OK")
</pallas_src>

<mosaic_0001>
module attributes {stable_mosaic.version = 11 : i64} {
  func.func @convpool_kernel(%arg0: memref<16x128xbf16, #tpu.memory_space<vmem>>, %arg1: memref<128x384xbf16, #tpu.memory_space<vmem>>, %arg2: memref<1x384xf32, #tpu.memory_space<vmem>>, %arg3: memref<16x384xf32, #tpu.memory_space<vmem>>, %arg4: memref<2x384xf32, #tpu.memory_space<vmem>>) attributes {dimension_semantics = [], scalar_prefetch = 0 : i64, scratch_operands = 0 : i64, tpu.core_type = #tpu.core_type<tc>} {
    %c0 = arith.constant 0 : index
    %c0_0 = arith.constant 0 : index
    %0 = vector.load %arg0[%c0, %c0_0] : memref<16x128xbf16, #tpu.memory_space<vmem>>, vector<16x128xbf16>
    %c0_1 = arith.constant 0 : index
    %c0_2 = arith.constant 0 : index
    %1 = vector.load %arg1[%c0_1, %c0_2] : memref<128x384xbf16, #tpu.memory_space<vmem>>, vector<128x384xbf16>
    %cst = arith.constant dense<0.000000e+00> : vector<16x384xf32>
    %2 = tpu.matmul %0, %1, %cst {dimension_numbers = #tpu.dot_dimension_numbers<[1], [0], [0], [1], [0, 0, 1, 1], [], []>} : vector<16x128xbf16>, vector<128x384xbf16>, vector<16x384xf32> -> vector<16x384xf32>
    %c0_3 = arith.constant 0 : index
    %c0_4 = arith.constant 0 : index
    %3 = vector.load %arg3[%c0_3, %c0_4] : memref<16x384xf32, #tpu.memory_space<vmem>>, vector<16x384xf32>
    %4 = arith.addf %2, %3 : vector<16x384xf32>
    %5 = vector.shape_cast %4 : vector<16x384xf32> to vector<2x8x384xf32>
    %cst_5 = arith.constant dense<0xFF800000> : vector<2x384xf32>
    %6 = vector.multi_reduction <maximumf>, %5, %cst_5 [1] : vector<2x8x384xf32> to vector<2x384xf32>
    %c0_6 = arith.constant 0 : index
    %c0_7 = arith.constant 0 : index
    %7 = vector.load %arg2[%c0_6, %c0_7] : memref<1x384xf32, #tpu.memory_space<vmem>>, vector<1x384xf32>
    %8 = vector.broadcast %7 : vector<1x384xf32> to vector<2x384xf32>
    %9 = arith.addf %6, %8 : vector<2x384xf32>
    %cst_8 = arith.constant 0.000000e+00 : f32
    %10 = vector.broadcast %cst_8 : f32 to vector<2x384xf32>
    %11 = arith.maximumf %9, %10 : vector<2x384xf32>
    %c0_9 = arith.constant 0 : index
    %c0_10 = arith.constant 0 : index
    %12 = vector.load %arg4[%c0_9, %c0_10] : memref<2x384xf32, #tpu.memory_space<vmem>>, vector<2x384xf32>
    tpu.vector_store %arg4[%c0_9, %c0_10], %11 {strides = array<i32>} : memref<2x384xf32, #tpu.memory_space<vmem>>, vector<2x384xf32>,
    return
  }
}

</mosaic_0001>

<llo_original>
// kernel: conv_pool.1
$region0: #{conv_pool.1}
  #allocation0 [shape = 'u32[]', space=smem, size = 0x4, offset = 0x4, fixed_abs, tag = 'smem constant byte address 0x4 - core index']
  #allocation1 [shape = 'u32[144,128]{1,0:T(1,128)}', space=vmem, size = 0x12000, scoped, tag = 'internal scratch']
  %s0 = inlined_call_operand.vmem [shape: bf16[16,128], index: 0, kind: input, shape index: {}]
  %s1 = inlined_call_operand.hbm [shape: bf16[128,384], index: 1, kind: input, shape index: {}]
  %s2 = inlined_call_operand.vmem [shape: f32[1,384], index: 2, kind: input, shape index: {}]
  %s3 = inlined_call_operand.vmem [shape: f32[16,384], index: 3, kind: input, shape index: {}]
  %s4 = inlined_call_operand.hbm [shape: f32[2,384], index: 4, kind: output, shape index: {}]
  %s5 = sld [smem:[#allocation0]]
  $region30: #{conv_pool.1} parent=0
    _
  %s7 = ssub.s32 1, %s5
  %s8 = scalar_select 0, %s7, %s5
  $region1: #{conv_pool.1} parent=0
    #allocation2 [shape = 'u8[98304]{0}', space=vmem, size = 0x18000, scoped, tag = 'input window, operand 1, single buffered']
    #allocation3 [shape = 's32[1]{0}', space=sflag, size = 0x4, scoped, tag = 'scoped memory for conv_pool.1']
    #allocation4 [shape = 's32[1]{0}', space=sflag, size = 0x4, scoped, tag = 'scoped memory for conv_pool.1']
    #allocation5 [shape = 'u8[3072]{0}', space=vmem, size = 0xc00, scoped, tag = 'output window, operand 0, single buffered']
    %9 = vsyncpa [#allocation3], 0
    %10 = vsyncpa [#allocation4], 0
    // Predicated region
    $region2: #{conv_pool.1} parent=1 // pred_check
      _
    $region3: #{conv_pool.1} parent=1 // pred_check_branch
      %12 = sbr.rel (0) target = $region5
    $region4: #{conv_pool.1} parent=1 // pred_region
      _
    $region5: #{conv_pool.1} parent=1 // pred_fallthru
      _
    // Predicated region
    $region6: #{conv_pool.1} parent=1 // pred_check
      _
    $region7: #{conv_pool.1} parent=1 // pred_check_branch
      %14 = sbr.rel (0) target = $region9
    $region8: #{conv_pool.1} parent=1 // pred_region
      %s16 = ssub.s32 3072, 3072
      %17 = vsyncadd [#allocation3], %s16
      %s18 = sshll.u32 [#allocation2], 4
      %s19 = int_to_ptr.vmem [resolvable:$true] %s18
      %24 = dma.hbm_to_vmem [thread:$0]  %s1, 3072, %s19, [#allocation3], 192, 192, 12
    $region9: #{conv_pool.1} parent=1 // pred_fallthru
      _
    // Predicated region
    $region10: #{conv_pool.1} parent=1 // pred_check
      _
    $region11: #{conv_pool.1} parent=1 // pred_check_branch
      %26 = sbr.rel (0) target = $region13
    $region12: #{conv_pool.1} parent=1 // pred_region
      _
    $region13: #{conv_pool.1} parent=1 // pred_fallthru
      _
    // Predicated region
    $region14: #{conv_pool.1} parent=1 // pred_check
      _
    $region15: #{conv_pool.1} parent=1 // pred_check_branch
      %28 = sbr.rel (0) target = $region17
    $region16: #{conv_pool.1} parent=1 // pred_region
      _
    $region17: #{conv_pool.1} parent=1 // pred_fallthru
      _
    // Predicated region
    $region18: #{conv_pool.1} parent=1 // pred_check
      _
    $region19: #{conv_pool.1} parent=1 // pred_check_branch
      %30 = sbr.rel (0) target = $region21
    $region20: #{conv_pool.1} parent=1 // pred_region
      %31 = dma.done [#allocation3], 3072
    $region21: #{conv_pool.1} parent=1 // pred_fallthru
      _
    %v33 = vld [vmem:[%s0] sm:$0xf]
    %v34 = vld [vmem:[%s0 + $0x4] sm:$0xf]
    %v35 = vld [vmem:[#allocation2] sm:$0xff]
    %v36 = vld [vmem:[#allocation2 + $0x8] sm:$0xf]
    %v37 = vld [vmem:[#allocation2 + $0xc] sm:$0xff]
    %v38 = vld [vmem:[#allocation2 + $0x14] sm:$0xf]
    %v39 = vld [vmem:[#allocation2 + $0x18] sm:$0xff]
    %v40 = vld [vmem:[#allocation2 + $0x20] sm:$0xf]
    %v41 = vld [vmem:[#allocation2 + $0x24] sm:$0xff]
    %v42 = vld [vmem:[#allocation2 + $0x2c] sm:$0xf]
    %v43 = vld [vmem:[#allocation2 + $0x30] sm:$0xff]
    %v44 = vld [vmem:[#allocation2 + $0x38] sm:$0xf]
    %v45 = vld [vmem:[#allocation2 + $0x3c] sm:$0xff]
    %v46 = vld [vmem:[#allocation2 + $0x44] sm:$0xf]
    %v47 = vld [vmem:[#allocation2 + $0x48] sm:$0xff]
    %v48 = vld [vmem:[#allocation2 + $0x50] sm:$0xf]
    %v49 = vld [vmem:[#allocation2 + $0x54] sm:$0xff]
    %v50 = vld [vmem:[#allocation2 + $0x5c] sm:$0xf]
    %v51 = vld [vmem:[#allocation2 + $0x60] sm:$0xff]
    %v52 = vld [vmem:[#allocation2 + $0x68] sm:$0xf]
    %v53 = vld [vmem:[#allocation2 + $0x6c] sm:$0xff]
    %v54 = vld [vmem:[#allocation2 + $0x74] sm:$0xf]
    %v55 = vld [vmem:[#allocation2 + $0x78] sm:$0xff]
    %v56 = vld [vmem:[#allocation2 + $0x80] sm:$0xf]
    %v57 = vld [vmem:[#allocation2 + $0x84] sm:$0xff]
    %v58 = vld [vmem:[#allocation2 + $0x8c] sm:$0xf]
    %v59 = vld [vmem:[#allocation2 + $0x90] sm:$0xff]
    %v60 = vld [vmem:[#allocation2 + $0x98] sm:$0xf]
    %v61 = vld [vmem:[#allocation2 + $0x9c] sm:$0xff]
    %v62 = vld [vmem:[#allocation2 + $0xa4] sm:$0xf]
    %v63 = vld [vmem:[#allocation2 + $0xa8] sm:$0xff]
    %v64 = vld [vmem:[#allocation2 + $0xb0] sm:$0xf]
    %v65 = vld [vmem:[#allocation2 + $0xb4] sm:$0xff]
    %v66 = vld [vmem:[#allocation2 + $0xbc] sm:$0xf]
    %v67 = vld [vmem:[%s3] sm:$0xff]
    %v68 = vld [vmem:[%s3 + $0x8] sm:$0xff]
    %v69 = vld [vmem:[%s3 + $0x10] sm:$0xff]
    %v70 = vld [vmem:[%s3 + $0x18] sm:$0xff]
    %v71 = vld [vmem:[%s3 + $0x20] sm:$0xff]
    %v72 = vld [vmem:[%s3 + $0x28] sm:$0xff]
    %v75 = vunpack.c.l.b16 %v33
    %v76 = vunpack.c.l.b16 %v34
    %v77 = vpack.c.b16 %v76, %v75
    %v111 = vunpack.c.l.b16 %v35
    %v112 = vunpack.c.h.b16 %v35
    %v113 = vunpack.c.l.b16 %v36
    %v114 = vunpack.c.l.b16 %v37
    %v115 = vunpack.c.h.b16 %v37
    %v116 = vunpack.c.l.b16 %v38
    %v117 = vunpack.c.l.b16 %v39
    %v118 = vunpack.c.h.b16 %v39
    %v119 = vunpack.c.l.b16 %v40
    %v120 = vunpack.c.l.b16 %v41
    %v121 = vunpack.c.h.b16 %v41
    %v122 = vunpack.c.l.b16 %v42
    %v123 = vunpack.c.l.b16 %v43
    %v124 = vunpack.c.h.b16 %v43
    %v125 = vunpack.c.l.b16 %v44
    %v126 = vunpack.c.l.b16 %v45
    %v127 = vunpack.c.h.b16 %v45
    %v128 = vunpack.c.l.b16 %v46
    %v129 = vunpack.c.l.b16 %v47
    %v130 = vunpack.c.h.b16 %v47
    %v131 = vunpack.c.l.b16 %v48
    %v132 = vunpack.c.l.b16 %v49
    %v133 = vunpack.c.h.b16 %v49
    %v134 = vunpack.c.l.b16 %v50
    %v135 = vunpack.c.l.b16 %v51
    %v136 = vunpack.c.h.b16 %v51
    %v137 = vunpack.c.l.b16 %v52
    %v138 = vunpack.c.l.b16 %v53
    %v139 = vunpack.c.h.b16 %v53
    %v140 = vunpack.c.l.b16 %v54
    %v141 = vunpack.c.l.b16 %v55
    %v142 = vunpack.c.h.b16 %v55
    %v143 = vunpack.c.l.b16 %v56
    %v144 = vunpack.c.l.b16 %v57
    %v145 = vunpack.c.h.b16 %v57
    %v146 = vunpack.c.l.b16 %v58
    %v147 = vunpack.c.l.b16 %v59
    %v148 = vunpack.c.h.b16 %v59
    %v149 = vunpack.c.l.b16 %v60
    %v150 = vunpack.c.l.b16 %v61
    %v151 = vunpack.c.h.b16 %v61
    %v152 = vunpack.c.l.b16 %v62
    %v153 = vunpack.c.l.b16 %v63
    %v154 = vunpack.c.h.b16 %v63
    %v155 = vunpack.c.l.b16 %v64
    %v156 = vunpack.c.l.b16 %v65
    %v157 = vunpack.c.h.b16 %v65
    %v158 = vunpack.c.l.b16 %v66
    %v159 = vpack.c.b16 %v114, %v111
    %v160 = vpack.c.b16 %v115, %v112
    %v161 = vpack.c.b16 %v116, %v113
    %v162 = vpack.c.b16 %v120, %v117
    %v163 = vpack.c.b16 %v121, %v118
    %v164 = vpack.c.b16 %v122, %v119
    %v165 = vpack.c.b16 %v126, %v123
    %v166 = vpack.c.b16 %v127, %v124
    %v167 = vpack.c.b16 %v128, %v125
    %v168 = vpack.c.b16 %v132, %v129
    %v169 = vpack.c.b16 %v133, %v130
    %v170 = vpack.c.b16 %v134, %v131
    %v171 = vpack.c.b16 %v138, %v135
    %v172 = vpack.c.b16 %v139, %v136
    %v173 = vpack.c.b16 %v140, %v137
    %v174 = vpack.c.b16 %v144, %v141
    %v175 = vpack.c.b16 %v145, %v142
    %v176 = vpack.c.b16 %v146, %v143
    %v177 = vpack.c.b16 %v150, %v147
    %v178 = vpack.c.b16 %v151, %v148
    %v179 = vpack.c.b16 %v152, %v149
    %v180 = vpack.c.b16 %v156, %v153
    %v181 = vpack.c.b16 %v157, %v154
    %v182 = vpack.c.b16 %v158, %v155
    %207 = vmatprep.subr.bf16.mxu0 %v160
    %208 = vmatpush1.bf16.msra.mxu0 %v159
    %209 = vmatprep.subr.bf16.mxu0 %v163
    %210 = vmatpush1.bf16.msra.mxu0 %v162
    %211 = vmatprep.subr.bf16.mxu0 %v166
    %212 = vmatpush1.bf16.msra.mxu0 %v165
    %213 = vmatprep.subr.bf16.mxu0 %v169
    %214 = vmatpush1.bf16.msra.mxu0 %v168
    %215 = vmatprep.subr.bf16.mxu0 %v172
    %216 = vmatpush1.bf16.msra.mxu0 %v171
    %217 = vmatprep.subr.bf16.mxu0 %v175
    %218 = vmatpush1.bf16.msra.mxu0 %v174
    %219 = vmatprep.subr.bf16.mxu0 %v178
    %220 = vmatpush1.bf16.msra.mxu0 %v177
    %221 = vmatprep.subr.bf16.mxu0 %v181
    %222 = vmatpush1.bf16.msra.mxu0 %v180
    %223 = vmatprep.subr.bf16.mxu0 0
    %224 = vmatpush1.bf16.msra.mxu0 0
    %225 = vmatprep.subr.bf16.mxu0 0
    %226 = vmatpush1.bf16.msra.mxu0 0
    %227 = vmatprep.subr.bf16.mxu0 0
    %228 = vmatpush1.bf16.msra.mxu0 0
    %229 = vmatprep.subr.bf16.mxu0 0
    %230 = vmatpush1.bf16.msra.mxu0 0
    %231 = vmatprep.subr.bf16.mxu0 0
    %232 = vmatpush1.bf16.msra.mxu0 0
    %233 = vmatprep.subr.bf16.mxu0 0
    %234 = vmatpush1.bf16.msra.mxu0 0
    %235 = vmatprep.subr.bf16.mxu0 0
    %236 = vmatpush1.bf16.msra.mxu0 0
    %237 = vmatprep.subr.bf16.mxu0 0
    %238 = vmatpush1.bf16.msra.mxu0 0
    %239 = vmatprep.mubr.bf16.mxu0 0
    %240 = vmatmul.mubr.bf16.gmra.mrb[0].mxu0 %v77
    %v241 = vpop.f32.mrb[0].mxu0
    %v242 = vadd.f32 %v67, %v241
    %v243 = vpop.f32.mrb[0].mxu0
    %v244 = vadd.f32 %v68, %v243
    %v245 = vpop.f32.mrb[0].mxu0
    %v246 = vadd.f32 %v70, %v245
    %v247 = vpop.f32.mrb[0].mxu0
    %v248 = vadd.f32 %v71, %v247
    %249 = vdwg.mxu0
    %250 = vmatprep.subr.bf16.mxu0 0
    %251 = vmatpush1.bf16.msra.mxu0 %v161
    %252 = vmatprep.subr.bf16.mxu0 0
    %253 = vmatpush1.bf16.msra.mxu0 %v164
    %254 = vmatprep.subr.bf16.mxu0 0
    %255 = vmatpush1.bf16.msra.mxu0 %v167
    %256 = vmatprep.subr.bf16.mxu0 0
    %257 = vmatpush1.bf16.msra.mxu0 %v170
    %258 = vmatprep.subr.bf16.mxu0 0
    %259 = vmatpush1.bf16.msra.mxu0 %v173
    %260 = vmatprep.subr.bf16.mxu0 0
    %261 = vmatpush1.bf16.msra.mxu0 %v176
    %262 = vmatprep.subr.bf16.mxu0 0
    %263 = vmatpush1.bf16.msra.mxu0 %v179
    %264 = vmatprep.subr.bf16.mxu0 0
    %265 = vmatpush1.bf16.msra.mxu0 %v182
    %266 = vmatprep.subr.bf16.mxu0 0
    %267 = vmatpush1.bf16.msra.mxu0 0
    %268 = vmatprep.subr.bf16.mxu0 0
    %269 = vmatpush1.bf16.msra.mxu0 0
    %270 = vmatprep.subr.bf16.mxu0 0
    %271 = vmatpush1.bf16.msra.mxu0 0
    %272 = vmatprep.subr.bf16.mxu0 0
    %273 = vmatpush1.bf16.msra.mxu0 0
    %274 = vmatprep.subr.bf16.mxu0 0
    %275 = vmatpush1.bf16.msra.mxu0 0
    %276 = vmatprep.subr.bf16.mxu0 0
    %277 = vmatpush1.bf16.msra.mxu0 0
    %278 = vmatprep.subr.bf16.mxu0 0
    %279 = vmatpush1.bf16.msra.mxu0 0
    %280 = vmatprep.subr.bf16.mxu0 0
    %281 = vmatpush1.bf16.msra.mxu0 0
    %282 = vmatprep.mubr.bf16.mxu0 0
    %283 = vmatmul.mubr.bf16.gmra.mrb[0].mxu0 %v77
    %v284 = vpop.f32.mrb[0].mxu0
    %v285 = vadd.f32 %v69, %v284
    %v286 = vpop.f32.mrb[0].mxu0
    %v287 = vpop.f32.mrb[0].mxu0
    %v288 = vadd.f32 %v72, %v287
    %v289 = vpop.f32.mrb[0].mxu0
    %290 = vdwg.mxu0
    %v291 = vrot.slane %v242, 4
    %v292 = vmax.f32 %v242, %v291
    %v293 = vrot.slane %v292, 2
    %v294 = vmax.f32 %v292, %v293
    %v295 = vrot.slane %v294, 1
    %v296 = vmax.f32 %v294, %v295
    %v297 = vrot.slane %v244, 4
    %v298 = vmax.f32 %v244, %v297
    %v299 = vrot.slane %v298, 2
    %v300 = vmax.f32 %v298, %v299
    %v301 = vrot.slane %v300, 1
    %v302 = vmax.f32 %v300, %v301
    %v303 = vrot.slane %v285, 4
    %v304 = vmax.f32 %v285, %v303
    %v305 = vrot.slane %v304, 2
    %v306 = vmax.f32 %v304, %v305
    %v307 = vrot.slane %v306, 1
    %v308 = vmax.f32 %v306, %v307
    %v309 = vrot.slane %v246, 4
    %v310 = vmax.f32 %v246, %v309
    %v311 = vrot.slane %v310, 2
    %v312 = vmax.f32 %v310, %v311
    %v313 = vrot.slane %v312, 1
    %v314 = vmax.f32 %v312, %v313
    %v315 = vrot.slane %v248, 4
    %v316 = vmax.f32 %v248, %v315
    %v317 = vrot.slane %v316, 2
    %v318 = vmax.f32 %v316, %v317
    %v319 = vrot.slane %v318, 1
    %v320 = vmax.f32 %v318, %v319
    %v321 = vrot.slane %v288, 4
    %v322 = vmax.f32 %v288, %v321
    %v323 = vrot.slane %v322, 2
    %v324 = vmax.f32 %v322, %v323
    %v325 = vrot.slane %v324, 1
    %v326 = vmax.f32 %v324, %v325
    %v327 = vld [vmem:[%s2] sm:$0x7]
    %v329 = vlaneseq
    %v330 = vshrl.u32 %v329, 7
    %v331 = vsub.s32 0, %v330
    %v332 = vrot.slane %v327, %v331
    %v333 = vlaneseq
    %v334 = vshrl.u32 %v333, 7
    %v335 = vsub.s32 1, %v334
    %v336 = vrot.slane %v327, %v335
    %v337 = vlaneseq
    %v338 = vshrl.u32 %v337, 7
    %v339 = vsub.s32 2, %v338
    %v340 = vrot.slane %v327, %v339
    %v344 = vadd.f32 %v296, %v332
    %v345 = vadd.f32 %v302, %v336
    %v346 = vadd.f32 %v308, %v340
    %v347 = vadd.f32 %v314, %v332
    %v348 = vadd.f32 %v320, %v336
    %v349 = vadd.f32 %v326, %v340
    %v350 = vmax.f32 %v344, 0.0
    %v351 = vmax.f32 %v345, 0.0
    %v352 = vmax.f32 %v346, 0.0
    %v353 = vmax.f32 %v347, 0.0
    %v354 = vmax.f32 %v348, 0.0
    %v355 = vmax.f32 %v349, 0.0
    %v362 = vcombine.low %v350, %v351
    %v364 = vunpack.c.l.s4 1983009808
    %v365 = vunpack.c.0.s8 %v364
    %v366 = vlaneseq
    %v367 = vshrl.u32 %v366, 7
    %v368 = vsub.s32 %v365, %v367
    %v369 = vrot.slane %v362, %v368
    %v371 = vunpack.c.l.s4 1983009808
    %v372 = vunpack.c.0.s8 %v371
    %v373 = vlaneseq
    %v374 = vshrl.u32 %v373, 7
    %v375 = vsub.s32 %v372, %v374
    %v376 = vrot.slane %v352, %v375
    %v377 = vcombine.low %v369, %v376
    %v378 = vcombine.low %v353, %v354
    %v380 = vunpack.c.l.s4 1983009808
    %v381 = vunpack.c.0.s8 %v380
    %v382 = vlaneseq
    %v383 = vshrl.u32 %v382, 7
    %v384 = vsub.s32 %v381, %v383
    %v385 = vrot.slane %v378, %v384
    %v387 = vunpack.c.l.s4 1983009808
    %v388 = vunpack.c.0.s8 %v387
    %v389 = vlaneseq
    %v390 = vshrl.u32 %v389, 7
    %v391 = vsub.s32 %v388, %v390
    %v392 = vrot.slane %v355, %v391
    %v393 = vcombine.low %v385, %v392
    %vm394 = vcmask 1044484
    %v395 = vsel %vm394, %v377, %v377
    %vm396 = vcmask 1046534
    %v397 = vsel %vm396, %v377, %v395
    %v398 = vrot.slane %v393, 7
    %vm399 = vcmask 1041409
    %v400 = vsel %vm399, %v398, %v397
    %vm401 = vcmask 1043459
    %v402 = vsel %vm401, %v398, %v400
    %vm403 = vcmask 1045509
    %v404 = vsel %vm403, %v398, %v402
    %vm405 = vcmask 1047559
    %v406 = vsel %vm405, %v398, %v404
    %408 = vst [vmem:[#allocation5] sm:$0x3f] %v406
    // Predicated region
    $region22: #{conv_pool.1} parent=1 // pred_check
      _
    $region23: #{conv_pool.1} parent=1 // pred_check_branch
      %410 = sbr.rel (0) target = $region25
    $region24: #{conv_pool.1} parent=1 // pred_region
      %s412 = ssub.s32 96, 96
      %413 = vsyncadd [#allocation4], %s412
      %s415 = sshll.u32 [#allocation5], 4
      %s416 = int_to_ptr.vmem [resolvable:$true] %s415
      %418 = dma.vmem_to_hbm [thread:$0]  %s416, 96, %s4, [#allocation4]
    $region25: #{conv_pool.1} parent=1 // pred_fallthru
      _
    // Predicated region
    $region26: #{conv_pool.1} parent=1 // pred_check
      _
    $region27: #{conv_pool.1} parent=1 // pred_check_branch
      %420 = sbr.rel (0) target = $region29
    $region28: #{conv_pool.1} parent=1 // pred_region
      %421 = dma.done [#allocation4], 96
    $region29: #{conv_pool.1} parent=1 // pred_fallthru
      _
    %422 = vsyncpa [#allocation3], 1
    %423 = vsyncpa [#allocation4], 1

</llo_original>
